<compile_context>
chip_gen: v7x
topology: tpu7x:2x2x1
jax: 0.10.0
libtpu: 0.0.40
codegen_flags: <defaults>
</compile_context>

<pallas_src>
import functools

import jax
import jax.numpy as jnp
from jax.experimental import pallas as pl
from jax.experimental.pallas import tpu as pltpu


# ----------------------------------------------------------------------------- helpers
def _align(x, m):
    return (x + m - 1) // m * m


def _slab_layout(F, H):
    """Static row/col layout of the consolidated f32 weight slab."""
    # row 0 : attn.weight as a row (F+H+1,)   [w_e | w_h | w_i]
    # row 1 : b_ih (3H,)        row 2 : b_hh (3H,)
    # row 3 : comb_b (H,)       row 4 : attn_combine weight col0 (input) (H,)
    # row 5 : out.weight (H,)
    cwf = 8                                  # F rows : attn_combine.weight[:,1:]^T  (F, H)
    gru = _align(cwf + F, 8)                 # 2H rows: block-diag [[w_ih^T,0],[0,w_hh^T]] (2H, 6H)
    rows = _align(gru + 2 * H, 8)
    cols = _align(max(6 * H, F + H + 1), 128)
    return dict(cwf=cwf, gru=gru, rows=rows, cols=cols)


def _packed_width(H, N):
    return _align(H + N + 1, 128)


def _pack_weight_slab(params, F, H):
    L = _slab_layout(F, H)
    slab = jnp.zeros((L["rows"], L["cols"]), jnp.float32)
    slab = slab.at[0, 0:F + H + 1].set(params["attn_w_t"][:, 0])
    slab = slab.at[1, 0:3 * H].set(params["b_ih"].reshape(3 * H))
    slab = slab.at[2, 0:3 * H].set(params["b_hh"].reshape(3 * H))
    slab = slab.at[3, 0:H].set(params["comb_b"].reshape(H))
    slab = slab.at[4, 0:H].set(params["comb_w_t"][0, :])          # input-scalar column
    slab = slab.at[5, 0:H].set(params["out_w_t"][:, 0])
    slab = slab.at[L["cwf"]:L["cwf"] + F, 0:H].set(params["comb_w_t"][1:, :])
    # block-diagonal GRU weights: concat([x, h]) @ [[w_ih^T, 0], [0, w_hh^T]]
    slab = slab.at[L["gru"]:L["gru"] + H, 0:3 * H].set(params["w_ih_t"])
    slab = slab.at[L["gru"] + H:L["gru"] + 2 * H, 3 * H:6 * H].set(params["w_hh_t"])
    return slab


# ----------------------------------------------------------------------------- kernel
def _attn_decoder_kernel(inp_ref, hid0_ref, enc_ref, maskadd_ref, w_ref,
                         packed_ref, *, compute_dtype):
    T = inp_ref.shape[0]
    B, N, F = enc_ref.shape
    H = hid0_ref.shape[1]
    L = _slab_layout(F, H)
    cdt = compute_dtype
    f32 = jnp.float32

    # ---------------- hoisted, loop-invariant prep (runs once) ----------------
    enc = enc_ref[...]                                    # (B, N, F) f32
    w_e = w_ref[0:1, 0:F]                                 # (1, F)
    w_h = w_ref[0:1, F:F + H]                             # (1, H)
    w_i = w_ref[0:1, F + H:F + H + 1]                     # (1, 1)
    b_ih = w_ref[1:2, 0:3 * H]                            # (1, 3H)
    b_hh = w_ref[2:3, 0:3 * H]                            # (1, 3H)
    comb_b = w_ref[3:4, 0:H]                              # (1, H)
    cw_in = w_ref[4:5, 0:H]                               # (1, H)
    ow_row = w_ref[5:6, 0:H]                              # (1, H)
    cw_feat = w_ref[L["cwf"]:L["cwf"] + F, 0:H].astype(cdt)        # (F, H)
    w_gru = w_ref[L["gru"]:L["gru"] + 2 * H, 0:6 * H].astype(cdt)  # (2H, 6H) block-diag

    # encoder contribution to the attention logits + additive mask (attn bias folded in)
    score_em = jnp.sum(enc * w_e.reshape(1, 1, F), axis=-1) + maskadd_ref[...]   # (B, N)
    enc_c = enc.astype(cdt)

    # ---------------- decode loop: hidden state carried in vregs --------------
    def step(t, h):
        inp = inp_ref[t]                                           # (B, 1)

        # attention logits / softmax (f32 throughout)
        score_h = jnp.sum(h * w_h, axis=-1, keepdims=True)         # (B, 1)
        scores = score_em + score_h + inp * w_i                    # (B, N)
        m = jnp.max(scores, axis=1, keepdims=True)
        e = jnp.exp(scores - m)
        inv = pl.reciprocal(jnp.sum(e, axis=1, keepdims=True), approx=True)
        attn_w = e * inv                                           # (B, N)

        # attn_applied[b,f] = sum_n attn_w[b,n] * enc[b,n,f]  (VPU mul + sublane reduce)
        attn_applied = jnp.sum(attn_w[:, :, None].astype(cdt) * enc_c, axis=1)  # (B, F)

        # attn_combine: Linear(F+1 -> H) over cat(input, attn_applied); relu; dropout=id
        comb = (jnp.dot(attn_applied.astype(cdt), cw_feat, preferred_element_type=f32)
                + inp * cw_in + comb_b)                            # (B, H)
        x = jnp.maximum(comb, 0.0)

        # single-step GRU cell (PyTorch gate order r, z, n) as ONE block-diag matmul
        xh = jnp.concatenate([x, h], axis=1).astype(cdt)           # (B, 2H)
        g = jnp.dot(xh, w_gru, preferred_element_type=f32)         # (B, 6H)
        gi = g[:, 0:3 * H] + b_ih
        gh = g[:, 3 * H:6 * H] + b_hh
        r = jax.nn.sigmoid(gi[:, 0:H] + gh[:, 0:H])
        z = jax.nn.sigmoid(gi[:, H:2 * H] + gh[:, H:2 * H])
        n = jnp.tanh(gi[:, 2 * H:3 * H] + r * gh[:, 2 * H:3 * H])
        h_new = (1.0 - z) * n + z * h                              # (B, H)

        # output head: relu -> Linear(H -> 1) as a lane reduce (out bias added in wrapper)
        y = jnp.maximum(h_new, 0.0)
        out = jnp.sum(y * ow_row, axis=-1, keepdims=True)          # (B, 1)

        # lane-aligned packed outputs: [ h_new (0:H) | attn_w (H:H+N) | out | pad ]
        packed_ref[t, :, 0:H] = h_new
        packed_ref[t, :, H:H + N] = attn_w
        packed_ref[t, :, H + N:H + N + 1] = out
        return h_new

    jax.lax.fori_loop(0, T, step, hid0_ref[...], unroll=(T <= 8))


# ----------------------------------------------------------------------------- wrappers
def _build_call(T, B, N, F, H, compute_dtype):
    PW = _packed_width(H, N)
    kernel = functools.partial(_attn_decoder_kernel, compute_dtype=compute_dtype)
    vmem = pltpu.MemorySpace.VMEM
    return pl.pallas_call(
        kernel,
        out_shape=jax.ShapeDtypeStruct((T, B, PW), jnp.float32),
        in_specs=[pl.BlockSpec(memory_space=vmem)] * 5,     # everything fully VMEM-resident
        out_specs=pl.BlockSpec(memory_space=vmem),
    )


def attn_decoder_forward_seq(inputs, hidden, encoder_outputs, attention_mask, params,
                             compute_dtype=jnp.float32):
    """Run T decode steps in one kernel call (teacher-forced per-step scalar inputs).

    inputs: (T, B), hidden: (1, B, H), encoder_outputs: (B, N, F), mask: (B, N).
    Returns (outs (T,B), final_hidden (1,B,H), attn_weights (T,B,N)).
    """
    T, B = inputs.shape
    _, N, F = encoder_outputs.shape
    H = hidden.shape[2]
    f32 = jnp.float32

    slab = _pack_weight_slab(params, F, H)
    # additive mask: masked_fill(mask==0, -1e10) becomes a single add; attn bias folded in
    maskadd = (jnp.where(attention_mask == 0.0, -1.0e10, 0.0)
               + params["attn_b"].reshape(())).astype(f32)

    packed = _build_call(T, B, N, F, H, compute_dtype)(
        inputs.reshape(T, B, 1).astype(f32),
        hidden.reshape(B, H).astype(f32),
        encoder_outputs.astype(f32),
        maskadd,
        slab,
    )
    outs = packed[:, :, H + N] + params["out_b"].reshape(())    # (T, B)
    h_final = packed[T - 1, :, 0:H].reshape(1, B, H)            # (1, B, H)
    attn_ws = packed[:, :, H:H + N]                             # (T, B, N)
    return outs, h_final, attn_ws


def attn_decoder_forward(inp, hidden, encoder_outputs, attention_mask, params,
                         compute_dtype=jnp.float32):
    """Single decode step matching AttnDecoderRNN.forward (combine='attn', eval mode)."""
    B = inp.shape[0]
    N = encoder_outputs.shape[1]
    outs, h_final, attn_ws = attn_decoder_forward_seq(
        inp.reshape(1, B), hidden, encoder_outputs, attention_mask, params,
        compute_dtype=compute_dtype)
    # Match PyTorch return shapes: (B,), (1, B, H), (B, N, 1)
    return outs.reshape(B), h_final, attn_ws.reshape(B, N, 1)


# ----------------------------------------------------------------------------- params / reference
def init_params(key, feature_size, hidden_size):
    F, H = feature_size, hidden_size
    ks = jax.random.split(key, 10)
    u = lambda k, shape, bound: jax.random.uniform(
        k, shape, jnp.float32, minval=-bound, maxval=bound)
    attn_w = u(ks[0], (1, F + H + 1), 1.0 / (F + H + 1) ** 0.5)   # nn.Linear(F+H+1, 1)
    attn_b = u(ks[1], (1, 1), 1.0 / (F + H + 1) ** 0.5)
    comb_w = u(ks[2], (H, F + 1), 1.0 / (F + 1) ** 0.5)           # nn.Linear(F+1, H)
    comb_b = u(ks[3], (1, H), 1.0 / (F + 1) ** 0.5)
    w_ih = u(ks[4], (3 * H, H), 1.0 / H ** 0.5)                   # nn.GRU(H, H), gate order r,z,n
    w_hh = u(ks[5], (3 * H, H), 1.0 / H ** 0.5)
    b_ih = u(ks[6], (1, 3 * H), 1.0 / H ** 0.5)
    b_hh = u(ks[7], (1, 3 * H), 1.0 / H ** 0.5)
    out_w = u(ks[8], (1, H), 1.0 / H ** 0.5)                      # nn.Linear(H, 1)
    out_b = u(ks[9], (1, 1), 1.0 / H ** 0.5)
    return {
        "attn_w_t": attn_w.T, "attn_b": attn_b,
        "comb_w_t": comb_w.T, "comb_b": comb_b,
        "w_ih_t": w_ih.T, "w_hh_t": w_hh.T, "b_ih": b_ih, "b_hh": b_hh,
        "out_w_t": out_w.T, "out_b": out_b,
    }


def _reference_step(inp, hid, enc, mask, params):
    """Pure-JAX reference for one AttnDecoderRNN step (eval mode)."""
    B, N, F = enc.shape
    H = hid.shape[1]
    cat = jnp.concatenate(
        [enc, jnp.broadcast_to(hid[:, None, :], (B, N, H)),
         jnp.broadcast_to(inp[:, None, None], (B, N, 1))], axis=2)
    scores = (cat @ params["attn_w_t"])[..., 0] + params["attn_b"].reshape(())
    scores = jnp.where(mask == 0.0, -1.0e10, scores)
    attn_w = jax.nn.softmax(scores, axis=1)
    attn_applied = jnp.einsum("bn,bnf->bf", attn_w, enc)
    comb_in = jnp.concatenate([inp[:, None], attn_applied], axis=1)
    x = jax.nn.relu(comb_in @ params["comb_w_t"] + params["comb_b"])
    gi = x @ params["w_ih_t"] + params["b_ih"]
    gh = hid @ params["w_hh_t"] + params["b_hh"]
    r = jax.nn.sigmoid(gi[:, :H] + gh[:, :H])
    z = jax.nn.sigmoid(gi[:, H:2 * H] + gh[:, H:2 * H])
    n = jnp.tanh(gi[:, 2 * H:] + r * gh[:, 2 * H:])
    h_new = (1.0 - z) * n + z * hid
    y = jax.nn.relu(h_new)
    out = (y @ params["out_w_t"] + params["out_b"])[:, 0]
    return out, h_new, attn_w


# ----------------------------------------------------------------------------- demo
if __name__ == "__main__":
    B, N, F, H, T = 8, 16, 16, 32, 4
    key = jax.random.PRNGKey(0)
    k_in, k_hid, k_enc, k_mask, k_par = jax.random.split(key, 5)

    inp = jax.random.normal(k_in, (B,), jnp.float32)
    inputs_seq = jax.random.normal(k_in, (T, B), jnp.float32)
    hidden = jax.random.normal(k_hid, (1, B, H), jnp.float32)
    encoder_outputs = jax.random.normal(k_enc, (B, N, F), jnp.float32)
    mask = (jax.random.uniform(k_mask, (B, N)) > 0.3).astype(jnp.float32)
    mask = mask.at[:, 0].set(1.0)      # never an all-zero row (softmax invariant)
    params = init_params(k_par, F, H)

    # ---- single step (module.forward semantics)
    out, h_new, attn_w = attn_decoder_forward(
        inp, hidden, encoder_outputs, mask, params)
    jax.block_until_ready((out, h_new, attn_w))
    assert out.shape == (B,)
    assert h_new.shape == (1, B, H)
    assert attn_w.shape == (B, N, 1)

    ref_out, ref_h, ref_attn = _reference_step(
        inp, hidden.reshape(B, H), encoder_outputs, mask, params)
    assert jnp.allclose(out, ref_out, atol=5e-2, rtol=5e-2)
    assert jnp.allclose(h_new.reshape(B, H), ref_h, atol=5e-2, rtol=5e-2)
    assert jnp.allclose(attn_w.reshape(B, N), ref_attn, atol=5e-2, rtol=5e-2)

    # ---- multi-step decode in one kernel call
    outs, h_T, attn_ws = attn_decoder_forward_seq(
        inputs_seq, hidden, encoder_outputs, mask, params)
    jax.block_until_ready((outs, h_T, attn_ws))
    assert outs.shape == (T, B)
    assert h_T.shape == (1, B, H)
    assert attn_ws.shape == (T, B, N)
    assert bool(jnp.all(jnp.isfinite(outs)))

    h_ref = hidden.reshape(B, H)
    for t in range(T):
        o_t, h_ref, a_t = _reference_step(inputs_seq[t], h_ref, encoder_outputs, mask, params)
        assert jnp.allclose(outs[t], o_t, atol=5e-2, rtol=5e-2)
        assert jnp.allclose(attn_ws[t], a_t, atol=5e-2, rtol=5e-2)
    assert jnp.allclose(h_T.reshape(B, H), h_ref, atol=5e-2, rtol=5e-2)

    print("KERNEL_OK")
</pallas_src>

<mosaic_0001>
module attributes {stable_mosaic.version = 11 : i64} {
  func.func @_attn_decoder_kernel(%arg0: memref<1x8x1xf32, #tpu.memory_space<vmem>>, %arg1: memref<8x32xf32, #tpu.memory_space<vmem>>, %arg2: memref<8x16x16xf32, #tpu.memory_space<vmem>>, %arg3: memref<8x16xf32, #tpu.memory_space<vmem>>, %arg4: memref<88x256xf32, #tpu.memory_space<vmem>>, %arg5: memref<1x8x128xf32, #tpu.memory_space<vmem>>) attributes {dimension_semantics = [], scalar_prefetch = 0 : i64, scratch_operands = 0 : i64, tpu.core_type = #tpu.core_type<tc>} {
    %c0 = arith.constant 0 : index
    %c0_0 = arith.constant 0 : index
    %c0_1 = arith.constant 0 : index
    %0 = vector.load %arg2[%c0, %c0_0, %c0_1] : memref<8x16x16xf32, #tpu.memory_space<vmem>>, vector<8x16x16xf32>
    %c0_2 = arith.constant 0 : index
    %c0_3 = arith.constant 0 : index
    %1 = vector.load %arg4[%c0_2, %c0_3] : memref<88x256xf32, #tpu.memory_space<vmem>>, vector<1x16xf32>
    %c0_4 = arith.constant 0 : index
    %c16 = arith.constant 16 : index
    %2 = vector.load %arg4[%c0_4, %c16] : memref<88x256xf32, #tpu.memory_space<vmem>>, vector<1x32xf32>
    %c0_5 = arith.constant 0 : index
    %c48 = arith.constant 48 : index
    %3 = vector.load %arg4[%c0_5, %c48] : memref<88x256xf32, #tpu.memory_space<vmem>>, vector<1x1xf32>
    %c1 = arith.constant 1 : index
    %c0_6 = arith.constant 0 : index
    %4 = vector.load %arg4[%c1, %c0_6] : memref<88x256xf32, #tpu.memory_space<vmem>>, vector<1x96xf32>
    %c2 = arith.constant 2 : index
    %c0_7 = arith.constant 0 : index
    %5 = vector.load %arg4[%c2, %c0_7] : memref<88x256xf32, #tpu.memory_space<vmem>>, vector<1x96xf32>
    %c3 = arith.constant 3 : index
    %c0_8 = arith.constant 0 : index
    %6 = vector.load %arg4[%c3, %c0_8] : memref<88x256xf32, #tpu.memory_space<vmem>>, vector<1x32xf32>
    %c4 = arith.constant 4 : index
    %c0_9 = arith.constant 0 : index
    %7 = vector.load %arg4[%c4, %c0_9] : memref<88x256xf32, #tpu.memory_space<vmem>>, vector<1x32xf32>
    %c5 = arith.constant 5 : index
    %c0_10 = arith.constant 0 : index
    %8 = vector.load %arg4[%c5, %c0_10] : memref<88x256xf32, #tpu.memory_space<vmem>>, vector<1x32xf32>
    %c8 = arith.constant 8 : index
    %c0_11 = arith.constant 0 : index
    %9 = vector.load %arg4[%c8, %c0_11] : memref<88x256xf32, #tpu.memory_space<vmem>>, vector<16x32xf32>
    %c24 = arith.constant 24 : index
    %c0_12 = arith.constant 0 : index
    %10 = vector.load %arg4[%c24, %c0_12] : memref<88x256xf32, #tpu.memory_space<vmem>>, vector<64x192xf32>
    %11 = vector.shape_cast %1 : vector<1x16xf32> to vector<1x1x16xf32>
    %12 = vector.broadcast %11 : vector<1x1x16xf32> to vector<8x16x16xf32>
    %13 = arith.mulf %0, %12 : vector<8x16x16xf32>
    %cst = arith.constant dense<0.000000e+00> : vector<8x16xf32>
    %14 = vector.multi_reduction <add>, %13, %cst [2] : vector<8x16x16xf32> to vector<8x16xf32>
    %c0_13 = arith.constant 0 : index
    %c0_14 = arith.constant 0 : index
    %15 = vector.load %arg3[%c0_13, %c0_14] : memref<8x16xf32, #tpu.memory_space<vmem>>, vector<8x16xf32>
    %16 = arith.addf %14, %15 : vector<8x16xf32>
    %c0_15 = arith.constant 0 : index
    %c0_16 = arith.constant 0 : index
    %17 = vector.load %arg1[%c0_15, %c0_16] : memref<8x32xf32, #tpu.memory_space<vmem>>, vector<8x32xf32>
    %c0_i32 = arith.constant 0 : i32
    %18 = arith.index_cast %c0_i32 : i32 to index
    %c0_17 = arith.constant 0 : index
    %c0_18 = arith.constant 0 : index
    %19 = vector.load %arg0[%18, %c0_17, %c0_18] : memref<1x8x1xf32, #tpu.memory_space<vmem>>, vector<1x8x1xf32>
    %20 = vector.shape_cast %19 : vector<1x8x1xf32> to vector<8x1xf32>
    %21 = vector.broadcast %2 : vector<1x32xf32> to vector<8x32xf32>
    %22 = arith.mulf %17, %21 : vector<8x32xf32>
    %cst_19 = arith.constant dense<0.000000e+00> : vector<8xf32>
    %23 = vector.multi_reduction <add>, %22, %cst_19 [1] : vector<8x32xf32> to vector<8xf32>
    %24 = vector.shape_cast %23 : vector<8xf32> to vector<8x1xf32>
    %25 = vector.broadcast %24 : vector<8x1xf32> to vector<8x16xf32>
    %26 = arith.addf %16, %25 : vector<8x16xf32>
    %27 = vector.broadcast %3 : vector<1x1xf32> to vector<8x1xf32>
    %28 = arith.mulf %20, %27 : vector<8x1xf32>
    %29 = vector.broadcast %28 : vector<8x1xf32> to vector<8x16xf32>
    %30 = arith.addf %26, %29 : vector<8x16xf32>
    %cst_20 = arith.constant dense<0xFF800000> : vector<8xf32>
    %31 = vector.multi_reduction <maximumf>, %30, %cst_20 [1] : vector<8x16xf32> to vector<8xf32>
    %32 = vector.shape_cast %31 : vector<8xf32> to vector<8x1xf32>
    %33 = vector.broadcast %32 : vector<8x1xf32> to vector<8x16xf32>
    %34 = arith.subf %30, %33 : vector<8x16xf32>
    %35 = math.exp %34 : vector<8x16xf32>
    %cst_21 = arith.constant dense<0.000000e+00> : vector<8xf32>
    %36 = vector.multi_reduction <add>, %35, %cst_21 [1] : vector<8x16xf32> to vector<8xf32>
    %37 = vector.shape_cast %36 : vector<8xf32> to vector<8x1xf32>
    %38 = tpu.reciprocal %37 {approx = true} : vector<8x1xf32> -> vector<8x1xf32>
    %39 = vector.broadcast %38 : vector<8x1xf32> to vector<8x16xf32>
    %40 = arith.mulf %35, %39 : vector<8x16xf32>
    %41 = vector.shape_cast %40 : vector<8x16xf32> to vector<8x16x1xf32>
    %42 = vector.broadcast %41 : vector<8x16x1xf32> to vector<8x16x16xf32>
    %43 = arith.mulf %42, %0 : vector<8x16x16xf32>
    %cst_22 = arith.constant dense<0.000000e+00> : vector<8x16xf32>
    %44 = vector.multi_reduction <add>, %43, %cst_22 [1] : vector<8x16x16xf32> to vector<8x16xf32>
    %cst_23 = arith.constant dense<0.000000e+00> : vector<8x32xf32>
    %45 = tpu.matmul %44, %9, %cst_23 {dimension_numbers = #tpu.dot_dimension_numbers<[1], [0], [0], [1], [0, 0, 1, 1], [], []>} : vector<8x16xf32>, vector<16x32xf32>, vector<8x32xf32> -> vector<8x32xf32>
    %46 = vector.broadcast %20 : vector<8x1xf32> to vector<8x32xf32>
    %47 = vector.broadcast %7 : vector<1x32xf32> to vector<8x32xf32>
    %48 = arith.mulf %46, %47 : vector<8x32xf32>
    %49 = arith.addf %45, %48 : vector<8x32xf32>
    %50 = vector.broadcast %6 : vector<1x32xf32> to vector<8x32xf32>
    %51 = arith.addf %49, %50 : vector<8x32xf32>
    %cst_24 = arith.constant 0.000000e+00 : f32
    %52 = vector.broadcast %cst_24 : f32 to vector<8x32xf32>
    %53 = arith.maximumf %51, %52 : vector<8x32xf32>
    %54 = tpu.concatenate %53, %17 in 1 : vector<8x32xf32>, vector<8x32xf32> -> vector<8x64xf32>
    %cst_25 = arith.constant dense<0.000000e+00> : vector<8x192xf32>
    %55 = tpu.matmul %54, %10, %cst_25 {dimension_numbers = #tpu.dot_dimension_numbers<[1], [0], [0], [1], [0, 0, 1, 1], [], []>} : vector<8x64xf32>, vector<64x192xf32>, vector<8x192xf32> -> vector<8x192xf32>
    %56 = vector.extract_strided_slice %55 {offsets = [0, 0], sizes = [8, 96], strides = [1, 1]} : vector<8x192xf32> to vector<8x96xf32>
    %57 = vector.broadcast %4 : vector<1x96xf32> to vector<8x96xf32>
    %58 = arith.addf %56, %57 : vector<8x96xf32>
    %59 = vector.extract_strided_slice %55 {offsets = [0, 96], sizes = [8, 96], strides = [1, 1]} : vector<8x192xf32> to vector<8x96xf32>
    %60 = vector.broadcast %5 : vector<1x96xf32> to vector<8x96xf32>
    %61 = arith.addf %59, %60 : vector<8x96xf32>
    %62 = vector.extract_strided_slice %58 {offsets = [0, 0], sizes = [8, 32], strides = [1, 1]} : vector<8x96xf32> to vector<8x32xf32>
    %63 = vector.extract_strided_slice %61 {offsets = [0, 0], sizes = [8, 32], strides = [1, 1]} : vector<8x96xf32> to vector<8x32xf32>
    %64 = arith.addf %62, %63 : vector<8x32xf32>
    %65 = arith.negf %64 : vector<8x32xf32>
    %66 = math.exp %65 : vector<8x32xf32>
    %cst_26 = arith.constant 1.000000e+00 : f32
    %67 = vector.broadcast %cst_26 : f32 to vector<8x32xf32>
    %68 = arith.addf %67, %66 : vector<8x32xf32>
    %69 = arith.divf %67, %68 : vector<8x32xf32>
    %70 = vector.extract_strided_slice %58 {offsets = [0, 32], sizes = [8, 32], strides = [1, 1]} : vector<8x96xf32> to vector<8x32xf32>
    %71 = vector.extract_strided_slice %61 {offsets = [0, 32], sizes = [8, 32], strides = [1, 1]} : vector<8x96xf32> to vector<8x32xf32>
    %72 = arith.addf %70, %71 : vector<8x32xf32>
    %73 = arith.negf %72 : vector<8x32xf32>
    %74 = math.exp %73 : vector<8x32xf32>
    %cst_27 = arith.constant 1.000000e+00 : f32
    %75 = vector.broadcast %cst_27 : f32 to vector<8x32xf32>
    %76 = arith.addf %75, %74 : vector<8x32xf32>
    %77 = arith.divf %75, %76 : vector<8x32xf32>
    %78 = vector.extract_strided_slice %58 {offsets = [0, 64], sizes = [8, 32], strides = [1, 1]} : vector<8x96xf32> to vector<8x32xf32>
    %79 = vector.extract_strided_slice %61 {offsets = [0, 64], sizes = [8, 32], strides = [1, 1]} : vector<8x96xf32> to vector<8x32xf32>
    %80 = arith.mulf %69, %79 : vector<8x32xf32>
    %81 = arith.addf %78, %80 : vector<8x32xf32>
    %82 = math.tanh %81 : vector<8x32xf32>
    %cst_28 = arith.constant 1.000000e+00 : f32
    %83 = vector.broadcast %cst_28 : f32 to vector<8x32xf32>
    %84 = arith.subf %83, %77 : vector<8x32xf32>
    %85 = arith.mulf %84, %82 : vector<8x32xf32>
    %86 = arith.mulf %77, %17 : vector<8x32xf32>
    %87 = arith.addf %85, %86 : vector<8x32xf32>
    %cst_29 = arith.constant 0.000000e+00 : f32
    %88 = vector.broadcast %cst_29 : f32 to vector<8x32xf32>
    %89 = arith.maximumf %87, %88 : vector<8x32xf32>
    %90 = vector.broadcast %8 : vector<1x32xf32> to vector<8x32xf32>
    %91 = arith.mulf %89, %90 : vector<8x32xf32>
    %cst_30 = arith.constant dense<0.000000e+00> : vector<8xf32>
    %92 = vector.multi_reduction <add>, %91, %cst_30 [1] : vector<8x32xf32> to vector<8xf32>
    %93 = vector.shape_cast %92 : vector<8xf32> to vector<8x1xf32>
    %94 = arith.index_cast %c0_i32 : i32 to index
    %c0_31 = arith.constant 0 : index
    %c0_32 = arith.constant 0 : index
    %95 = vector.load %arg5[%94, %c0_31, %c0_32] : memref<1x8x128xf32, #tpu.memory_space<vmem>>, vector<1x8x32xf32>
    %96 = vector.shape_cast %95 : vector<1x8x32xf32> to vector<8x32xf32>
    %97 = vector.shape_cast %87 : vector<8x32xf32> to vector<1x8x32xf32>
    tpu.vector_store %arg5[%94, %c0_31, %c0_32], %97 {strides = array<i32>} : memref<1x8x128xf32, #tpu.memory_space<vmem>>, vector<1x8x32xf32>,
    %98 = arith.index_cast %c0_i32 : i32 to index
    %c0_33 = arith.constant 0 : index
    %c32 = arith.constant 32 : index
    %99 = vector.load %arg5[%98, %c0_33, %c32] : memref<1x8x128xf32, #tpu.memory_space<vmem>>, vector<1x8x16xf32>
    %100 = vector.shape_cast %99 : vector<1x8x16xf32> to vector<8x16xf32>
    %101 = vector.shape_cast %40 : vector<8x16xf32> to vector<1x8x16xf32>
    tpu.vector_store %arg5[%98, %c0_33, %c32], %101 {strides = array<i32>} : memref<1x8x128xf32, #tpu.memory_space<vmem>>, vector<1x8x16xf32>,
    %102 = arith.index_cast %c0_i32 : i32 to index
    %c0_34 = arith.constant 0 : index
    %c48_35 = arith.constant 48 : index
    %103 = vector.load %arg5[%102, %c0_34, %c48_35] : memref<1x8x128xf32, #tpu.memory_space<vmem>>, vector<1x8x1xf32>
    %104 = vector.shape_cast %103 : vector<1x8x1xf32> to vector<8x1xf32>
    %105 = vector.shape_cast %93 : vector<8x1xf32> to vector<1x8x1xf32>
    tpu.vector_store %arg5[%102, %c0_34, %c48_35], %105 {strides = array<i32>} : memref<1x8x128xf32, #tpu.memory_space<vmem>>, vector<1x8x1xf32>,
    %c1_i32 = arith.constant 1 : i32
    return
  }
}

</mosaic_0001>

<llo_original>
// kernel: tpu_custom_call.1
$region0: #{tpu_custom_call.1}
  #allocation0 [shape = 'u32[]', space=smem, size = 0x4, offset = 0x4, fixed_abs, tag = 'smem constant byte address 0x4 - core index']
  #allocation1 [shape = 'u32[144,128]{1,0:T(1,128)}', space=vmem, size = 0x12000, scoped, tag = 'internal scratch']
  %s0 = inlined_call_operand.vmem [shape: f32[1,8,1], index: 0, kind: input, shape index: {}]
  %s1 = inlined_call_operand.vmem [shape: f32[8,32], index: 1, kind: input, shape index: {}]
  %s2 = inlined_call_operand.hbm [shape: f32[8,16,16], index: 2, kind: input, shape index: {}]
  %s3 = inlined_call_operand.vmem [shape: f32[8,16], index: 3, kind: input, shape index: {}]
  %s4 = inlined_call_operand.hbm [shape: f32[88,256], index: 4, kind: input, shape index: {}]
  %s5 = inlined_call_operand.hbm [shape: f32[1,8,128], index: 5, kind: output, shape index: {}]
  %s6 = sld [smem:[#allocation0]]
  $region38: #{tpu_custom_call.1} parent=0
    _
  %s8 = ssub.s32 1, %s6
  %s9 = scalar_select 0, %s8, %s6
  $region1: #{tpu_custom_call.1} parent=0
    #allocation2 [shape = 'u8[65536]{0}', space=vmem, size = 0x10000, scoped, tag = 'input window, operand 2, single buffered']
    #allocation3 [shape = 's32[1]{0}', space=sflag, size = 0x4, scoped, tag = 'scoped memory for tpu_custom_call.1']
    #allocation4 [shape = 's32[1]{0}', space=sflag, size = 0x4, scoped, tag = 'scoped memory for tpu_custom_call.1']
    #allocation5 [shape = 'u8[90112]{0}', space=vmem, size = 0x16000, scoped, tag = 'input window, operand 4, single buffered']
    #allocation6 [shape = 's32[1]{0}', space=sflag, size = 0x4, scoped, tag = 'scoped memory for tpu_custom_call.1']
    #allocation7 [shape = 'u8[4096]{0}', space=vmem, size = 0x1000, scoped, tag = 'output window, operand 0, single buffered']
    %10 = vsyncpa [#allocation3], 0
    %11 = vsyncpa [#allocation6], 0
    %12 = vsyncpa [#allocation4], 0
    // Predicated region
    $region2: #{tpu_custom_call.1} parent=1 // pred_check
      _
    $region3: #{tpu_custom_call.1} parent=1 // pred_check_branch
      %14 = sbr.rel (0) target = $region5
    $region4: #{tpu_custom_call.1} parent=1 // pred_region
      _
    $region5: #{tpu_custom_call.1} parent=1 // pred_fallthru
      _
    // Predicated region
    $region6: #{tpu_custom_call.1} parent=1 // pred_check
      _
    $region7: #{tpu_custom_call.1} parent=1 // pred_check_branch
      %16 = sbr.rel (0) target = $region9
    $region8: #{tpu_custom_call.1} parent=1 // pred_region
      _
    $region9: #{tpu_custom_call.1} parent=1 // pred_fallthru
      _
    // Predicated region
    $region10: #{tpu_custom_call.1} parent=1 // pred_check
      _
    $region11: #{tpu_custom_call.1} parent=1 // pred_check_branch
      %18 = sbr.rel (0) target = $region13
    $region12: #{tpu_custom_call.1} parent=1 // pred_region
      %s20 = ssub.s32 2048, 2048
      %21 = vsyncadd [#allocation3], %s20
      %s22 = sshll.u32 [#allocation2], 4
      %s23 = int_to_ptr.vmem [resolvable:$true] %s22
      %28 = dma.hbm_to_vmem [thread:$0]  %s2, 2048, %s23, [#allocation3], 128, 128, 8
    $region13: #{tpu_custom_call.1} parent=1 // pred_fallthru
      _
    // Predicated region
    $region14: #{tpu_custom_call.1} parent=1 // pred_check
      _
    $region15: #{tpu_custom_call.1} parent=1 // pred_check_branch
      %30 = sbr.rel (0) target = $region17
    $region16: #{tpu_custom_call.1} parent=1 // pred_region
      _
    $region17: #{tpu_custom_call.1} parent=1 // pred_fallthru
      _
    // Predicated region
    $region18: #{tpu_custom_call.1} parent=1 // pred_check
      _
    $region19: #{tpu_custom_call.1} parent=1 // pred_check_branch
      %32 = sbr.rel (0) target = $region21
    $region20: #{tpu_custom_call.1} parent=1 // pred_region
      %s34 = ssub.s32 2816, 2816
      %35 = vsyncadd [#allocation6], %s34
      %s36 = sshll.u32 [#allocation5], 4
      %s37 = int_to_ptr.vmem [resolvable:$true] %s36
      %42 = dma.hbm_to_vmem [thread:$0]  %s4, 2816, %s37, [#allocation6], 256, 256, 16
    $region21: #{tpu_custom_call.1} parent=1 // pred_fallthru
      _
    // Predicated region
    $region22: #{tpu_custom_call.1} parent=1 // pred_check
      _
    $region23: #{tpu_custom_call.1} parent=1 // pred_check_branch
      %44 = sbr.rel (0) target = $region25
    $region24: #{tpu_custom_call.1} parent=1 // pred_region
      %45 = dma.done [#allocation3], 2048
    $region25: #{tpu_custom_call.1} parent=1 // pred_fallthru
      _
    // Predicated region
    $region26: #{tpu_custom_call.1} parent=1 // pred_check
      _
    $region27: #{tpu_custom_call.1} parent=1 // pred_check_branch
      %47 = sbr.rel (0) target = $region29
    $region28: #{tpu_custom_call.1} parent=1 // pred_region
      %48 = dma.done [#allocation6], 2816
    $region29: #{tpu_custom_call.1} parent=1 // pred_fallthru
      _
    %v49 = vld [vmem:[#allocation2] sm:$0xff]
    %v50 = vld [vmem:[#allocation2 + $0x8] sm:$0xff]
    %v51 = vld [vmem:[#allocation2 + $0x10] sm:$0xff]
    %v52 = vld [vmem:[#allocation2 + $0x18] sm:$0xff]
    %v53 = vld [vmem:[#allocation2 + $0x20] sm:$0xff]
    %v54 = vld [vmem:[#allocation2 + $0x28] sm:$0xff]
    %v55 = vld [vmem:[#allocation2 + $0x30] sm:$0xff]
    %v56 = vld [vmem:[#allocation2 + $0x38] sm:$0xff]
    %v57 = vld [vmem:[#allocation2 + $0x40] sm:$0xff]
    %v58 = vld [vmem:[#allocation2 + $0x48] sm:$0xff]
    %v59 = vld [vmem:[#allocation2 + $0x50] sm:$0xff]
    %v60 = vld [vmem:[#allocation2 + $0x58] sm:$0xff]
    %v61 = vld [vmem:[#allocation2 + $0x60] sm:$0xff]
    %v62 = vld [vmem:[#allocation2 + $0x68] sm:$0xff]
    %v63 = vld [vmem:[#allocation2 + $0x70] sm:$0xff]
    %v64 = vld [vmem:[#allocation2 + $0x78] sm:$0xff]
    %v65 = vld [vmem:[#allocation5] ss:$0 sm:$0xff]
    %v66 = vld [vmem:[#allocation5 + $0x1] ss:$0 sm:$0xff]
    %v67 = vld [vmem:[#allocation5 + $0x2] ss:$0 sm:$0xff]
    %v68 = vld [vmem:[#allocation5 + $0x3] ss:$0 sm:$0xff]
    %v69 = vld [vmem:[#allocation5 + $0x4] ss:$0 sm:$0xff]
    %v70 = vld [vmem:[#allocation5 + $0x5] ss:$0 sm:$0xff]
    %v71 = vld [vmem:[#allocation5 + $0x10] sm:$0xff]
    %v72 = vld [vmem:[#allocation5 + $0x20] sm:$0xff]
    %v73 = vld [vmem:[#allocation5 + $0x30] sm:$0xff]
    %v74 = vld [vmem:[#allocation5 + $0x38] sm:$0xff]
    %v75 = vld [vmem:[#allocation5 + $0x40] sm:$0xff]
    %v76 = vld [vmem:[#allocation5 + $0x48] sm:$0xff]
    %v77 = vld [vmem:[#allocation5 + $0x50] sm:$0xff]
    %v78 = vld [vmem:[#allocation5 + $0x58] sm:$0xff]
    %v79 = vld [vmem:[#allocation5 + $0x60] sm:$0xff]
    %v80 = vld [vmem:[#allocation5 + $0x68] sm:$0xff]
    %v81 = vld [vmem:[#allocation5 + $0x70] sm:$0xff]
    %v82 = vld [vmem:[#allocation5 + $0x78] sm:$0xff]
    %v83 = vld [vmem:[#allocation5 + $0x80] sm:$0xff]
    %v84 = vld [vmem:[#allocation5 + $0x88] sm:$0xff]
    %v85 = vld [vmem:[#allocation5 + $0x90] sm:$0xff]
    %v86 = vld [vmem:[#allocation5 + $0x98] sm:$0xff]
    %v87 = vld [vmem:[#allocation5 + $0xa0] sm:$0xff]
    %v88 = vld [vmem:[#allocation5 + $0xa8] sm:$0xff]
    %v89 = vmul.f32 %v49, %v65
    %v90 = vmul.f32 %v50, %v65
    %v91 = vmul.f32 %v51, %v65
    %v92 = vmul.f32 %v52, %v65
    %v93 = vmul.f32 %v53, %v65
    %v94 = vmul.f32 %v54, %v65
    %v95 = vmul.f32 %v55, %v65
    %v96 = vmul.f32 %v56, %v65
    %v97 = vmul.f32 %v57, %v65
    %v98 = vmul.f32 %v58, %v65
    %v99 = vmul.f32 %v59, %v65
    %v100 = vmul.f32 %v60, %v65
    %v101 = vmul.f32 %v61, %v65
    %v102 = vmul.f32 %v62, %v65
    %v103 = vmul.f32 %v63, %v65
    %v104 = vmul.f32 %v64, %v65
    %vm105 = vcmask 130048
    %v106 = vsel %vm105, %v89, 0.0
    %107 = vadd.xlane.f32.xlu0 %v106
    %v108 = vpop.xlane.xlu0 %107
    %v109 = vsel %vm105, %v90, 0.0
    %110 = vadd.xlane.f32.xlu0 %v109
    %v111 = vpop.xlane.xlu0 %110
    %v112 = vsel %vm105, %v91, 0.0
    %113 = vadd.xlane.f32.xlu0 %v112
    %v114 = vpop.xlane.xlu0 %113
    %v115 = vsel %vm105, %v92, 0.0
    %116 = vadd.xlane.f32.xlu0 %v115
    %v117 = vpop.xlane.xlu0 %116
    %v118 = vsel %vm105, %v93, 0.0
    %119 = vadd.xlane.f32.xlu0 %v118
    %v120 = vpop.xlane.xlu0 %119
    %v121 = vsel %vm105, %v94, 0.0
    %122 = vadd.xlane.f32.xlu0 %v121
    %v123 = vpop.xlane.xlu0 %122
    %v124 = vsel %vm105, %v95, 0.0
    %125 = vadd.xlane.f32.xlu0 %v124
    %v126 = vpop.xlane.xlu0 %125
    %v127 = vsel %vm105, %v96, 0.0
    %128 = vadd.xlane.f32.xlu0 %v127
    %v129 = vpop.xlane.xlu0 %128
    %v130 = vsel %vm105, %v97, 0.0
    %131 = vadd.xlane.f32.xlu0 %v130
    %v132 = vpop.xlane.xlu0 %131
    %v133 = vsel %vm105, %v98, 0.0
    %134 = vadd.xlane.f32.xlu0 %v133
    %v135 = vpop.xlane.xlu0 %134
    %v136 = vsel %vm105, %v99, 0.0
    %137 = vadd.xlane.f32.xlu0 %v136
    %v138 = vpop.xlane.xlu0 %137
    %v139 = vsel %vm105, %v100, 0.0
    %140 = vadd.xlane.f32.xlu0 %v139
    %v141 = vpop.xlane.xlu0 %140
    %v142 = vsel %vm105, %v101, 0.0
    %143 = vadd.xlane.f32.xlu0 %v142
    %v144 = vpop.xlane.xlu0 %143
    %v145 = vsel %vm105, %v102, 0.0
    %146 = vadd.xlane.f32.xlu0 %v145
    %v147 = vpop.xlane.xlu0 %146
    %v148 = vsel %vm105, %v103, 0.0
    %149 = vadd.xlane.f32.xlu0 %v148
    %v150 = vpop.xlane.xlu0 %149
    %v151 = vsel %vm105, %v104, 0.0
    %152 = vadd.xlane.f32.xlu0 %v151
    %v153 = vpop.xlane.xlu0 %152
    %v154 = vld [vmem:[%s3] sm:$0xff]
    %v156 = vlaneseq
    %v157 = vshrl.u32 %v156, 7
    %v158 = vsub.s32 0, %v157
    %v159 = vrot.slane %v154, %v158
    %161 = vbcast.lane.b32.xlu0 %v159, 256
    %v162 = vpop.permute.xlu0 %161
    %s164 = sor.u32 256, 8
    %165 = vbcast.lane.b32.xlu0 %v159, %s164
    %v166 = vpop.permute.xlu0 %165
    %v167 = vlaneseq
    %v168 = vshrl.u32 %v167, 7
    %v169 = vsub.s32 1, %v168
    %v170 = vrot.slane %v154, %v169
    %172 = vbcast.lane.b32.xlu0 %v170, 256
    %v173 = vpop.permute.xlu0 %172
    %s175 = sor.u32 256, 8
    %176 = vbcast.lane.b32.xlu0 %v170, %s175
    %v177 = vpop.permute.xlu0 %176
    %v178 = vlaneseq
    %v179 = vshrl.u32 %v178, 7
    %v180 = vsub.s32 2, %v179
    %v181 = vrot.slane %v154, %v180
    %183 = vbcast.lane.b32.xlu0 %v181, 256
    %v184 = vpop.permute.xlu0 %183
    %s186 = sor.u32 256, 8
    %187 = vbcast.lane.b32.xlu0 %v181, %s186
    %v188 = vpop.permute.xlu0 %187
    %v189 = vlaneseq
    %v190 = vshrl.u32 %v189, 7
    %v191 = vsub.s32 3, %v190
    %v192 = vrot.slane %v154, %v191
    %194 = vbcast.lane.b32.xlu0 %v192, 256
    %v195 = vpop.permute.xlu0 %194
    %s197 = sor.u32 256, 8
    %198 = vbcast.lane.b32.xlu0 %v192, %s197
    %v199 = vpop.permute.xlu0 %198
    %v200 = vlaneseq
    %v201 = vshrl.u32 %v200, 7
    %v202 = vsub.s32 4, %v201
    %v203 = vrot.slane %v154, %v202
    %205 = vbcast.lane.b32.xlu0 %v203, 256
    %v206 = vpop.permute.xlu0 %205
    %s208 = sor.u32 256, 8
    %209 = vbcast.lane.b32.xlu0 %v203, %s208
    %v210 = vpop.permute.xlu0 %209
    %v211 = vlaneseq
    %v212 = vshrl.u32 %v211, 7
    %v213 = vsub.s32 5, %v212
    %v214 = vrot.slane %v154, %v213
    %216 = vbcast.lane.b32.xlu0 %v214, 256
    %v217 = vpop.permute.xlu0 %216
    %s219 = sor.u32 256, 8
    %220 = vbcast.lane.b32.xlu0 %v214, %s219
    %v221 = vpop.permute.xlu0 %220
    %v222 = vlaneseq
    %v223 = vshrl.u32 %v222, 7
    %v224 = vsub.s32 6, %v223
    %v225 = vrot.slane %v154, %v224
    %227 = vbcast.lane.b32.xlu0 %v225, 256
    %v228 = vpop.permute.xlu0 %227
    %s230 = sor.u32 256, 8
    %231 = vbcast.lane.b32.xlu0 %v225, %s230
    %v232 = vpop.permute.xlu0 %231
    %v233 = vlaneseq
    %v234 = vshrl.u32 %v233, 7
    %v235 = vsub.s32 7, %v234
    %v236 = vrot.slane %v154, %v235
    %238 = vbcast.lane.b32.xlu0 %v236, 256
    %v239 = vpop.permute.xlu0 %238
    %s241 = sor.u32 256, 8
    %242 = vbcast.lane.b32.xlu0 %v236, %s241
    %v243 = vpop.permute.xlu0 %242
    %v260 = vadd.f32 %v108, %v162
    %v261 = vadd.f32 %v111, %v166
    %v262 = vadd.f32 %v114, %v173
    %v263 = vadd.f32 %v117, %v177
    %v264 = vadd.f32 %v120, %v184
    %v265 = vadd.f32 %v123, %v188
    %v266 = vadd.f32 %v126, %v195
    %v267 = vadd.f32 %v129, %v199
    %v268 = vadd.f32 %v132, %v206
    %v269 = vadd.f32 %v135, %v210
    %v270 = vadd.f32 %v138, %v217
    %v271 = vadd.f32 %v141, %v221
    %v272 = vadd.f32 %v144, %v228
    %v273 = vadd.f32 %v147, %v232
    %v274 = vadd.f32 %v150, %v239
    %v275 = vadd.f32 %v153, %v243
    %v276 = vld [vmem:[%s1] sm:$0xff]
    %v277 = vld [vmem:[%s0] sm:$0xff]
    %279 = vrot.lane.b32.xlu0 %v65, 112
    %v280 = vpop.permute.xlu0 %279
    %v282 = vmul.f32 %v276, %v280
    %vm283 = vcmask 261120
    %v284 = vsel %vm283, %v282, 0.0
    %285 = vadd.xlane.f32.xlu0 %v284
    %v286 = vpop.xlane.xlu0 %285
    %v288 = vlaneseq
    %v289 = vshrl.u32 %v288, 7
    %v290 = vsub.s32 0, %v289
    %v291 = vrot.slane %v286, %v290
    %v292 = vlaneseq
    %v293 = vshrl.u32 %v292, 7
    %v294 = vsub.s32 1, %v293
    %v295 = vrot.slane %v286, %v294
    %v296 = vlaneseq
    %v297 = vshrl.u32 %v296, 7
    %v298 = vsub.s32 2, %v297
    %v299 = vrot.slane %v286, %v298
    %v300 = vlaneseq
    %v301 = vshrl.u32 %v300, 7
    %v302 = vsub.s32 3, %v301
    %v303 = vrot.slane %v286, %v302
    %v304 = vlaneseq
    %v305 = vshrl.u32 %v304, 7
    %v306 = vsub.s32 4, %v305
    %v307 = vrot.slane %v286, %v306
    %v308 = vlaneseq
    %v309 = vshrl.u32 %v308, 7
    %v310 = vsub.s32 5, %v309
    %v311 = vrot.slane %v286, %v310
    %v312 = vlaneseq
    %v313 = vshrl.u32 %v312, 7
    %v314 = vsub.s32 6, %v313
    %v315 = vrot.slane %v286, %v314
    %v316 = vlaneseq
    %v317 = vshrl.u32 %v316, 7
    %v318 = vsub.s32 7, %v317
    %v319 = vrot.slane %v286, %v318
    %v328 = vadd.f32 %v260, %v291
    %v329 = vadd.f32 %v261, %v291
    %v330 = vadd.f32 %v262, %v295
    %v331 = vadd.f32 %v263, %v295
    %v332 = vadd.f32 %v264, %v299
    %v333 = vadd.f32 %v265, %v299
    %v334 = vadd.f32 %v266, %v303
    %v335 = vadd.f32 %v267, %v303
    %v336 = vadd.f32 %v268, %v307
    %v337 = vadd.f32 %v269, %v307
    %v338 = vadd.f32 %v270, %v311
    %v339 = vadd.f32 %v271, %v311
    %v340 = vadd.f32 %v272, %v315
    %v341 = vadd.f32 %v273, %v315
    %v342 = vadd.f32 %v274, %v319
    %v343 = vadd.f32 %v275, %v319
    %344 = vrot.lane.b32.xlu0 %v65, 80
    %v345 = vpop.permute.xlu0 %344
    %v347 = vmul.f32 %v277, %v345
    %349 = vset.pattern.permute.xlu0 0
    %350 = vperm.xlu0 %349, %v347
    %v351 = vpop.permute.xlu0 %350
    %v352 = vlaneseq
    %v353 = vshrl.u32 %v352, 7
    %v354 = vsub.s32 0, %v353
    %v355 = vrot.slane %v351, %v354
    %v356 = vlaneseq
    %v357 = vshrl.u32 %v356, 7
    %v358 = vsub.s32 1, %v357
    %v359 = vrot.slane %v351, %v358
    %v360 = vlaneseq
    %v361 = vshrl.u32 %v360, 7
    %v362 = vsub.s32 2, %v361
    %v363 = vrot.slane %v351, %v362
    %v364 = vlaneseq
    %v365 = vshrl.u32 %v364, 7
    %v366 = vsub.s32 3, %v365
    %v367 = vrot.slane %v351, %v366
    %v368 = vlaneseq
    %v369 = vshrl.u32 %v368, 7
    %v370 = vsub.s32 4, %v369
    %v371 = vrot.slane %v351, %v370
    %v372 = vlaneseq
    %v373 = vshrl.u32 %v372, 7
    %v374 = vsub.s32 5, %v373
    %v375 = vrot.slane %v351, %v374
    %v376 = vlaneseq
    %v377 = vshrl.u32 %v376, 7
    %v378 = vsub.s32 6, %v377
    %v379 = vrot.slane %v351, %v378
    %v380 = vlaneseq
    %v381 = vshrl.u32 %v380, 7
    %v382 = vsub.s32 7, %v381
    %v383 = vrot.slane %v351, %v382
    %v392 = vadd.f32 %v328, %v355
    %v393 = vadd.f32 %v329, %v355
    %v394 = vadd.f32 %v330, %v359
    %v395 = vadd.f32 %v331, %v359
    %v396 = vadd.f32 %v332, %v363
    %v397 = vadd.f32 %v333, %v363
    %v398 = vadd.f32 %v334, %v367
    %v399 = vadd.f32 %v335, %v367
    %v400 = vadd.f32 %v336, %v371
    %v401 = vadd.f32 %v337, %v371
    %v402 = vadd.f32 %v338, %v375
    %v403 = vadd.f32 %v339, %v375
    %v404 = vadd.f32 %v340, %v379
    %v405 = vadd.f32 %v341, %v379
    %v406 = vadd.f32 %v342, %v383
    %v407 = vadd.f32 %v343, %v383
    %424 = vset.pattern.permute.xlu0 0
    %425 = vperm.xlu0 %424, %v392
    %v426 = vpop.permute.xlu0 %425
    %427 = vset.pattern.permute.xlu0 0
    %428 = vperm.xlu0 %427, %v393
    %v429 = vpop.permute.xlu0 %428
    %430 = vset.pattern.permute.xlu0 0
    %431 = vperm.xlu0 %430, %v394
    %v432 = vpop.permute.xlu0 %431
    %433 = vset.pattern.permute.xlu0 0
    %434 = vperm.xlu0 %433, %v395
    %v435 = vpop.permute.xlu0 %434
    %436 = vset.pattern.permute.xlu0 0
    %437 = vperm.xlu0 %436, %v396
    %v438 = vpop.permute.xlu0 %437
    %439 = vset.pattern.permute.xlu0 0
    %440 = vperm.xlu0 %439, %v397
    %v441 = vpop.permute.xlu0 %440
    %442 = vset.pattern.permute.xlu0 0
    %443 = vperm.xlu0 %442, %v398
    %v444 = vpop.permute.xlu0 %443
    %445 = vset.pattern.permute.xlu0 0
    %446 = vperm.xlu0 %445, %v399
    %v447 = vpop.permute.xlu0 %446
    %448 = vset.pattern.permute.xlu0 0
    %449 = vperm.xlu0 %448, %v400
    %v450 = vpop.permute.xlu0 %449
    %451 = vset.pattern.permute.xlu0 0
    %452 = vperm.xlu0 %451, %v401
    %v453 = vpop.permute.xlu0 %452
    %454 = vset.pattern.permute.xlu0 0
    %455 = vperm.xlu0 %454, %v402
    %v456 = vpop.permute.xlu0 %455
    %457 = vset.pattern.permute.xlu0 0
    %458 = vperm.xlu0 %457, %v403
    %v459 = vpop.permute.xlu0 %458
    %460 = vset.pattern.permute.xlu0 0
    %461 = vperm.xlu0 %460, %v404
    %v462 = vpop.permute.xlu0 %461
    %463 = vset.pattern.permute.xlu0 0
    %464 = vperm.xlu0 %463, %v405
    %v465 = vpop.permute.xlu0 %464
    %466 = vset.pattern.permute.xlu0 0
    %467 = vperm.xlu0 %466, %v406
    %v468 = vpop.permute.xlu0 %467
    %469 = vset.pattern.permute.xlu0 0
    %470 = vperm.xlu0 %469, %v407
    %v471 = vpop.permute.xlu0 %470
    %v472 = vlaneseq
    %v473 = vand.u32 %v472, 127
    %v474 = vlaneseq
    %v475 = vshrl.u32 %v474, 7
    %v476 = vsub.s32 %v473, %v475
    %v477 = vrot.slane %v426, %v476
    %v478 = vadd.s32 %v473, 4294967288
    %v479 = vlaneseq
    %v480 = vshrl.u32 %v479, 7
    %v481 = vsub.s32 %v478, %v480
    %v482 = vrot.slane %v429, %v481
    %vm483 = vcmask 130112
    %v484 = vsel %vm483, %v482, %v477
    %v485 = vlaneseq
    %v486 = vshrl.u32 %v485, 7
    %v487 = vsub.s32 %v473, %v486
    %v488 = vrot.slane %v432, %v487
    %v489 = vlaneseq
    %v490 = vshrl.u32 %v489, 7
    %v491 = vsub.s32 %v478, %v490
    %v492 = vrot.slane %v435, %v491
    %v493 = vsel %vm483, %v492, %v488
    %v494 = vlaneseq
    %v495 = vshrl.u32 %v494, 7
    %v496 = vsub.s32 %v473, %v495
    %v497 = vrot.slane %v438, %v496
    %v498 = vlaneseq
    %v499 = vshrl.u32 %v498, 7
    %v500 = vsub.s32 %v478, %v499
    %v501 = vrot.slane %v441, %v500
    %v502 = vsel %vm483, %v501, %v497
    %v503 = vlaneseq
    %v504 = vshrl.u32 %v503, 7
    %v505 = vsub.s32 %v473, %v504
    %v506 = vrot.slane %v444, %v505
    %v507 = vlaneseq
    %v508 = vshrl.u32 %v507, 7
    %v509 = vsub.s32 %v478, %v508
    %v510 = vrot.slane %v447, %v509
    %v511 = vsel %vm483, %v510, %v506
    %v512 = vlaneseq
    %v513 = vshrl.u32 %v512, 7
    %v514 = vsub.s32 %v473, %v513
    %v515 = vrot.slane %v450, %v514
    %v516 = vlaneseq
    %v517 = vshrl.u32 %v516, 7
    %v518 = vsub.s32 %v478, %v517
    %v519 = vrot.slane %v453, %v518
    %v520 = vsel %vm483, %v519, %v515
    %v521 = vlaneseq
    %v522 = vshrl.u32 %v521, 7
    %v523 = vsub.s32 %v473, %v522
    %v524 = vrot.slane %v456, %v523
    %v525 = vlaneseq
    %v526 = vshrl.u32 %v525, 7
    %v527 = vsub.s32 %v478, %v526
    %v528 = vrot.slane %v459, %v527
    %v529 = vsel %vm483, %v528, %v524
    %v530 = vlaneseq
    %v531 = vshrl.u32 %v530, 7
    %v532 = vsub.s32 %v473, %v531
    %v533 = vrot.slane %v462, %v532
    %v534 = vlaneseq
    %v535 = vshrl.u32 %v534, 7
    %v536 = vsub.s32 %v478, %v535
    %v537 = vrot.slane %v465, %v536
    %v538 = vsel %vm483, %v537, %v533
    %v539 = vlaneseq
    %v540 = vshrl.u32 %v539, 7
    %v541 = vsub.s32 %v473, %v540
    %v542 = vrot.slane %v468, %v541
    %v543 = vlaneseq
    %v544 = vshrl.u32 %v543, 7
    %v545 = vsub.s32 %v478, %v544
    %v546 = vrot.slane %v471, %v545
    %v547 = vsel %vm483, %v546, %v542
    %vm548 = vcmask 1041409
    %v549 = vsel %vm548, %v493, %v484
    %vm550 = vcmask 1042434
    %v551 = vsel %vm550, %v502, %v549
    %vm552 = vcmask 1043459
    %v553 = vsel %vm552, %v511, %v551
    %vm554 = vcmask 1044484
    %v555 = vsel %vm554, %v520, %v553
    %vm556 = vcmask 1045509
    %v557 = vsel %vm556, %v529, %v555
    %vm558 = vcmask 1046534
    %v559 = vsel %vm558, %v538, %v557
    %vm560 = vcmask 1047559
    %v561 = vsel %vm560, %v547, %v559
    %v563 = vsel %vm105, %v561, -inf
    %564 = vmax.xlane.f32.xlu0 %v563
    %v565 = vpop.xlane.xlu0 %564
    %v567 = vlaneseq
    %v568 = vshrl.u32 %v567, 7
    %v569 = vsub.s32 0, %v568
    %v570 = vrot.slane %v565, %v569
    %v571 = vlaneseq
    %v572 = vshrl.u32 %v571, 7
    %v573 = vsub.s32 1, %v572
    %v574 = vrot.slane %v565, %v573
    %v575 = vlaneseq
    %v576 = vshrl.u32 %v575, 7
    %v577 = vsub.s32 2, %v576
    %v578 = vrot.slane %v565, %v577
    %v579 = vlaneseq
    %v580 = vshrl.u32 %v579, 7
    %v581 = vsub.s32 3, %v580
    %v582 = vrot.slane %v565, %v581
    %v583 = vlaneseq
    %v584 = vshrl.u32 %v583, 7
    %v585 = vsub.s32 4, %v584
    %v586 = vrot.slane %v565, %v585
    %v587 = vlaneseq
    %v588 = vshrl.u32 %v587, 7
    %v589 = vsub.s32 5, %v588
    %v590 = vrot.slane %v565, %v589
    %v591 = vlaneseq
    %v592 = vshrl.u32 %v591, 7
    %v593 = vsub.s32 6, %v592
    %v594 = vrot.slane %v565, %v593
    %v595 = vlaneseq
    %v596 = vshrl.u32 %v595, 7
    %v597 = vsub.s32 7, %v596
    %v598 = vrot.slane %v565, %v597
    %v607 = vsub.f32 %v392, %v570
    %v608 = vsub.f32 %v393, %v570
    %v609 = vsub.f32 %v394, %v574
    %v610 = vsub.f32 %v395, %v574
    %v611 = vsub.f32 %v396, %v578
    %v612 = vsub.f32 %v397, %v578
    %v613 = vsub.f32 %v398, %v582
    %v614 = vsub.f32 %v399, %v582
    %v615 = vsub.f32 %v400, %v586
    %v616 = vsub.f32 %v401, %v586
    %v617 = vsub.f32 %v402, %v590
    %v618 = vsub.f32 %v403, %v590
    %v619 = vsub.f32 %v404, %v594
    %v620 = vsub.f32 %v405, %v594
    %v621 = vsub.f32 %v406, %v598
    %v622 = vsub.f32 %v407, %v598
    %v623 = vmul.f32 %v607, 1.442695
    %v624 = vpow.pop %v623
    %v625 = vmul.f32 %v608, 1.442695
    %v626 = vpow.pop %v625
    %v627 = vmul.f32 %v609, 1.442695
    %v628 = vpow.pop %v627
    %v629 = vmul.f32 %v610, 1.442695
    %v630 = vpow.pop %v629
    %v631 = vmul.f32 %v611, 1.442695
    %v632 = vpow.pop %v631
    %v633 = vmul.f32 %v612, 1.442695
    %v634 = vpow.pop %v633
    %v635 = vmul.f32 %v613, 1.442695
    %v636 = vpow.pop %v635
    %v637 = vmul.f32 %v614, 1.442695
    %v638 = vpow.pop %v637
    %v639 = vmul.f32 %v615, 1.442695
    %v640 = vpow.pop %v639
    %v641 = vmul.f32 %v616, 1.442695
    %v642 = vpow.pop %v641
    %v643 = vmul.f32 %v617, 1.442695
    %v644 = vpow.pop %v643
    %v645 = vmul.f32 %v618, 1.442695
    %v646 = vpow.pop %v645
    %v647 = vmul.f32 %v619, 1.442695
    %v648 = vpow.pop %v647
    %v649 = vmul.f32 %v620, 1.442695
    %v650 = vpow.pop %v649
    %v651 = vmul.f32 %v621, 1.442695
    %v652 = vpow.pop %v651
    %v653 = vmul.f32 %v622, 1.442695
    %v654 = vpow.pop %v653
    %671 = vset.pattern.permute.xlu0 0
    %672 = vperm.xlu0 %671, %v624
    %v673 = vpop.permute.xlu0 %672
    %674 = vset.pattern.permute.xlu0 0
    %675 = vperm.xlu0 %674, %v626
    %v676 = vpop.permute.xlu0 %675
    %677 = vset.pattern.permute.xlu0 0
    %678 = vperm.xlu0 %677, %v628
    %v679 = vpop.permute.xlu0 %678
    %680 = vset.pattern.permute.xlu0 0
    %681 = vperm.xlu0 %680, %v630
    %v682 = vpop.permute.xlu0 %681
    %683 = vset.pattern.permute.xlu0 0
    %684 = vperm.xlu0 %683, %v632
    %v685 = vpop.permute.xlu0 %684
    %686 = vset.pattern.permute.xlu0 0
    %687 = vperm.xlu0 %686, %v634
    %v688 = vpop.permute.xlu0 %687
    %689 = vset.pattern.permute.xlu0 0
    %690 = vperm.xlu0 %689, %v636
    %v691 = vpop.permute.xlu0 %690
    %692 = vset.pattern.permute.xlu0 0
    %693 = vperm.xlu0 %692, %v638
    %v694 = vpop.permute.xlu0 %693
    %695 = vset.pattern.permute.xlu0 0
    %696 = vperm.xlu0 %695, %v640
    %v697 = vpop.permute.xlu0 %696
    %698 = vset.pattern.permute.xlu0 0
    %699 = vperm.xlu0 %698, %v642
    %v700 = vpop.permute.xlu0 %699
    %701 = vset.pattern.permute.xlu0 0
    %702 = vperm.xlu0 %701, %v644
    %v703 = vpop.permute.xlu0 %702
    %704 = vset.pattern.permute.xlu0 0
    %705 = vperm.xlu0 %704, %v646
    %v706 = vpop.permute.xlu0 %705
    %707 = vset.pattern.permute.xlu0 0
    %708 = vperm.xlu0 %707, %v648
    %v709 = vpop.permute.xlu0 %708
    %710 = vset.pattern.permute.xlu0 0
    %711 = vperm.xlu0 %710, %v650
    %v712 = vpop.permute.xlu0 %711
    %713 = vset.pattern.permute.xlu0 0
    %714 = vperm.xlu0 %713, %v652
    %v715 = vpop.permute.xlu0 %714
    %716 = vset.pattern.permute.xlu0 0
    %717 = vperm.xlu0 %716, %v654
    %v718 = vpop.permute.xlu0 %717
    %v719 = vlaneseq
    %v720 = vshrl.u32 %v719, 7
    %v721 = vsub.s32 %v473, %v720
    %v722 = vrot.slane %v673, %v721
    %v723 = vlaneseq
    %v724 = vshrl.u32 %v723, 7
    %v725 = vsub.s32 %v478, %v724
    %v726 = vrot.slane %v676, %v725
    %v727 = vsel %vm483, %v726, %v722
    %v728 = vlaneseq
    %v729 = vshrl.u32 %v728, 7
    %v730 = vsub.s32 %v473, %v729
    %v731 = vrot.slane %v679, %v730
    %v732 = vlaneseq
    %v733 = vshrl.u32 %v732, 7
    %v734 = vsub.s32 %v478, %v733
    %v735 = vrot.slane %v682, %v734
    %v736 = vsel %vm483, %v735, %v731
    %v737 = vlaneseq
    %v738 = vshrl.u32 %v737, 7
    %v739 = vsub.s32 %v473, %v738
    %v740 = vrot.slane %v685, %v739
    %v741 = vlaneseq
    %v742 = vshrl.u32 %v741, 7
    %v743 = vsub.s32 %v478, %v742
    %v744 = vrot.slane %v688, %v743
    %v745 = vsel %vm483, %v744, %v740
    %v746 = vlaneseq
    %v747 = vshrl.u32 %v746, 7
    %v748 = vsub.s32 %v473, %v747
    %v749 = vrot.slane %v691, %v748
    %v750 = vlaneseq
    %v751 = vshrl.u32 %v750, 7
    %v752 = vsub.s32 %v478, %v751
    %v753 = vrot.slane %v694, %v752
    %v754 = vsel %vm483, %v753, %v749
    %v755 = vlaneseq
    %v756 = vshrl.u32 %v755, 7
    %v757 = vsub.s32 %v473, %v756
    %v758 = vrot.slane %v697, %v757
    %v759 = vlaneseq
    %v760 = vshrl.u32 %v759, 7
    %v761 = vsub.s32 %v478, %v760
    %v762 = vrot.slane %v700, %v761
    %v763 = vsel %vm483, %v762, %v758
    %v764 = vlaneseq
    %v765 = vshrl.u32 %v764, 7
    %v766 = vsub.s32 %v473, %v765
    %v767 = vrot.slane %v703, %v766
    %v768 = vlaneseq
    %v769 = vshrl.u32 %v768, 7
    %v770 = vsub.s32 %v478, %v769
    %v771 = vrot.slane %v706, %v770
    %v772 = vsel %vm483, %v771, %v767
    %v773 = vlaneseq
    %v774 = vshrl.u32 %v773, 7
    %v775 = vsub.s32 %v473, %v774
    %v776 = vrot.slane %v709, %v775
    %v777 = vlaneseq
    %v778 = vshrl.u32 %v777, 7
    %v779 = vsub.s32 %v478, %v778
    %v780 = vrot.slane %v712, %v779
    %v781 = vsel %vm483, %v780, %v776
    %v782 = vlaneseq
    %v783 = vshrl.u32 %v782, 7
    %v784 = vsub.s32 %v473, %v783
    %v785 = vrot.slane %v715, %v784
    %v786 = vlaneseq
    %v787 = vshrl.u32 %v786, 7
    %v788 = vsub.s32 %v478, %v787
    %v789 = vrot.slane %v718, %v788
    %v790 = vsel %vm483, %v789, %v785
    %v791 = vsel %vm548, %v736, %v727
    %v792 = vsel %vm550, %v745, %v791
    %v793 = vsel %vm552, %v754, %v792
    %v794 = vsel %vm554, %v763, %v793
    %v795 = vsel %vm556, %v772, %v794
    %v796 = vsel %vm558, %v781, %v795
    %v797 = vsel %vm560, %v790, %v796
    %v799 = vsel %vm105, %v797, 0.0
    %800 = vadd.xlane.f32.xlu0 %v799
    %v801 = vpop.xlane.xlu0 %800
    %v802 = vrcp.pop %v801
    %v804 = vlaneseq
    %v805 = vshrl.u32 %v804, 7
    %v806 = vsub.s32 0, %v805
    %v807 = vrot.slane %v802, %v806
    %v808 = vlaneseq
    %v809 = vshrl.u32 %v808, 7
    %v810 = vsub.s32 1, %v809
    %v811 = vrot.slane %v802, %v810
    %v812 = vlaneseq
    %v813 = vshrl.u32 %v812, 7
    %v814 = vsub.s32 2, %v813
    %v815 = vrot.slane %v802, %v814
    %v816 = vlaneseq
    %v817 = vshrl.u32 %v816, 7
    %v818 = vsub.s32 3, %v817
    %v819 = vrot.slane %v802, %v818
    %v820 = vlaneseq
    %v821 = vshrl.u32 %v820, 7
    %v822 = vsub.s32 4, %v821
    %v823 = vrot.slane %v802, %v822
    %v824 = vlaneseq
    %v825 = vshrl.u32 %v824, 7
    %v826 = vsub.s32 5, %v825
    %v827 = vrot.slane %v802, %v826
    %v828 = vlaneseq
    %v829 = vshrl.u32 %v828, 7
    %v830 = vsub.s32 6, %v829
    %v831 = vrot.slane %v802, %v830
    %v832 = vlaneseq
    %v833 = vshrl.u32 %v832, 7
    %v834 = vsub.s32 7, %v833
    %v835 = vrot.slane %v802, %v834
    %v844 = vmul.f32 %v624, %v807
    %v845 = vmul.f32 %v626, %v807
    %v846 = vmul.f32 %v628, %v811
    %v847 = vmul.f32 %v630, %v811
    %v848 = vmul.f32 %v632, %v815
    %v849 = vmul.f32 %v634, %v815
    %v850 = vmul.f32 %v636, %v819
    %v851 = vmul.f32 %v638, %v819
    %v852 = vmul.f32 %v640, %v823
    %v853 = vmul.f32 %v642, %v823
    %v854 = vmul.f32 %v644, %v827
    %v855 = vmul.f32 %v646, %v827
    %v856 = vmul.f32 %v648, %v831
    %v857 = vmul.f32 %v650, %v831
    %v858 = vmul.f32 %v652, %v835
    %v859 = vmul.f32 %v654, %v835
    %861 = vset.pattern.permute.xlu0 0
    %862 = vperm.xlu0 %861, %v844
    %v863 = vpop.permute.xlu0 %862
    %866 = vset.pattern.permute.xlu0 0
    %867 = vperm.xlu0 %866, %v845
    %v868 = vpop.permute.xlu0 %867
    %871 = vset.pattern.permute.xlu0 0
    %872 = vperm.xlu0 %871, %v846
    %v873 = vpop.permute.xlu0 %872
    %876 = vset.pattern.permute.xlu0 0
    %877 = vperm.xlu0 %876, %v847
    %v878 = vpop.permute.xlu0 %877
    %881 = vset.pattern.permute.xlu0 0
    %882 = vperm.xlu0 %881, %v848
    %v883 = vpop.permute.xlu0 %882
    %886 = vset.pattern.permute.xlu0 0
    %887 = vperm.xlu0 %886, %v849
    %v888 = vpop.permute.xlu0 %887
    %891 = vset.pattern.permute.xlu0 0
    %892 = vperm.xlu0 %891, %v850
    %v893 = vpop.permute.xlu0 %892
    %896 = vset.pattern.permute.xlu0 0
    %897 = vperm.xlu0 %896, %v851
    %v898 = vpop.permute.xlu0 %897
    %901 = vset.pattern.permute.xlu0 0
    %902 = vperm.xlu0 %901, %v852
    %v903 = vpop.permute.xlu0 %902
    %906 = vset.pattern.permute.xlu0 0
    %907 = vperm.xlu0 %906, %v853
    %v908 = vpop.permute.xlu0 %907
    %911 = vset.pattern.permute.xlu0 0
    %912 = vperm.xlu0 %911, %v854
    %v913 = vpop.permute.xlu0 %912
    %916 = vset.pattern.permute.xlu0 0
    %917 = vperm.xlu0 %916, %v855
    %v918 = vpop.permute.xlu0 %917
    %921 = vset.pattern.permute.xlu0 0
    %922 = vperm.xlu0 %921, %v856
    %v923 = vpop.permute.xlu0 %922
    %926 = vset.pattern.permute.xlu0 0
    %927 = vperm.xlu0 %926, %v857
    %v928 = vpop.permute.xlu0 %927
    %931 = vset.pattern.permute.xlu0 0
    %932 = vperm.xlu0 %931, %v858
    %v933 = vpop.permute.xlu0 %932
    %936 = vset.pattern.permute.xlu0 0
    %937 = vperm.xlu0 %936, %v859
    %v938 = vpop.permute.xlu0 %937
    %v940 = vmul.f32 %v863, %v49
    %v941 = vmul.f32 %v868, %v50
    %v942 = vmul.f32 %v873, %v51
    %v943 = vmul.f32 %v878, %v52
    %v944 = vmul.f32 %v883, %v53
    %v945 = vmul.f32 %v888, %v54
    %v946 = vmul.f32 %v893, %v55
    %v947 = vmul.f32 %v898, %v56
    %v948 = vmul.f32 %v903, %v57
    %v949 = vmul.f32 %v908, %v58
    %v950 = vmul.f32 %v913, %v59
    %v951 = vmul.f32 %v918, %v60
    %v952 = vmul.f32 %v923, %v61
    %v953 = vmul.f32 %v928, %v62
    %v954 = vmul.f32 %v933, %v63
    %v955 = vmul.f32 %v938, %v64
    %v956 = vsel %vm105, %v940, 0.0
    %v957 = vsel %vm105, %v941, 0.0
    %v958 = vadd.f32 %v956, %v957
    %v959 = vrot.slane %v958, 4
    %v960 = vadd.f32 %v958, %v959
    %v961 = vrot.slane %v960, 2
    %v962 = vadd.f32 %v960, %v961
    %v963 = vrot.slane %v962, 1
    %v964 = vadd.f32 %v962, %v963
    %v965 = vsel %vm105, %v942, 0.0
    %v966 = vsel %vm105, %v943, 0.0
    %v967 = vadd.f32 %v965, %v966
    %v968 = vrot.slane %v967, 4
    %v969 = vadd.f32 %v967, %v968
    %v970 = vrot.slane %v969, 2
    %v971 = vadd.f32 %v969, %v970
    %v972 = vrot.slane %v971, 1
    %v973 = vadd.f32 %v971, %v972
    %v974 = vsel %vm105, %v944, 0.0
    %v975 = vsel %vm105, %v945, 0.0
    %v976 = vadd.f32 %v974, %v975
    %v977 = vrot.slane %v976, 4
    %v978 = vadd.f32 %v976, %v977
    %v979 = vrot.slane %v978, 2
    %v980 = vadd.f32 %v978, %v979
    %v981 = vrot.slane %v980, 1
    %v982 = vadd.f32 %v980, %v981
    %v983 = vsel %vm105, %v946, 0.0
    %v984 = vsel %vm105, %v947, 0.0
    %v985 = vadd.f32 %v983, %v984
    %v986 = vrot.slane %v985, 4
    %v987 = vadd.f32 %v985, %v986
    %v988 = vrot.slane %v987, 2
    %v989 = vadd.f32 %v987, %v988
    %v990 = vrot.slane %v989, 1
    %v991 = vadd.f32 %v989, %v990
    %v992 = vsel %vm105, %v948, 0.0
    %v993 = vsel %vm105, %v949, 0.0
    %v994 = vadd.f32 %v992, %v993
    %v995 = vrot.slane %v994, 4
    %v996 = vadd.f32 %v994, %v995
    %v997 = vrot.slane %v996, 2
    %v998 = vadd.f32 %v996, %v997
    %v999 = vrot.slane %v998, 1
    %v1000 = vadd.f32 %v998, %v999
    %v1001 = vsel %vm105, %v950, 0.0
    %v1002 = vsel %vm105, %v951, 0.0
    %v1003 = vadd.f32 %v1001, %v1002
    %v1004 = vrot.slane %v1003, 4
    %v1005 = vadd.f32 %v1003, %v1004
    %v1006 = vrot.slane %v1005, 2
    %v1007 = vadd.f32 %v1005, %v1006
    %v1008 = vrot.slane %v1007, 1
    %v1009 = vadd.f32 %v1007, %v1008
    %v1010 = vsel %vm105, %v952, 0.0
    %v1011 = vsel %vm105, %v953, 0.0
    %v1012 = vadd.f32 %v1010, %v1011
    %v1013 = vrot.slane %v1012, 4
    %v1014 = vadd.f32 %v1012, %v1013
    %v1015 = vrot.slane %v1014, 2
    %v1016 = vadd.f32 %v1014, %v1015
    %v1017 = vrot.slane %v1016, 1
    %v1018 = vadd.f32 %v1016, %v1017
    %v1019 = vsel %vm105, %v954, 0.0
    %v1020 = vsel %vm105, %v955, 0.0
    %v1021 = vadd.f32 %v1019, %v1020
    %v1022 = vrot.slane %v1021, 4
    %v1023 = vadd.f32 %v1021, %v1022
    %v1024 = vrot.slane %v1023, 2
    %v1025 = vadd.f32 %v1023, %v1024
    %v1026 = vrot.slane %v1025, 1
    %v1027 = vadd.f32 %v1025, %v1026
    %1029 = vset.pattern.permute.xlu0 0
    %1030 = vperm.xlu0 %1029, %v277
    %v1031 = vpop.permute.xlu0 %1030
    %v1033 = vmul.f32 %v1031, %v69
    %v1042 = vsel %vm548, %v973, %v964
    %v1043 = vsel %vm550, %v982, %v1042
    %v1044 = vsel %vm552, %v991, %v1043
    %v1045 = vsel %vm554, %v1000, %v1044
    %v1046 = vsel %vm556, %v1009, %v1045
    %v1047 = vsel %vm558, %v1018, %v1046
    %v1048 = vsel %vm560, %v1027, %v1047
    %v1049 = vsel %vm105, %v1048, 0
    %1051 = vmatprep.subr.mxu0 0.0
    %1052 = vmatpush1.msra.mxu0 %v71
    %1053 = vmatprep.subr.mxu0 0.0
    %1054 = vmatpush1.msra.mxu0 %v72
    %1055 = vmatprep.subr.mxu0 0.0
    %1056 = vmatpush1.msra.mxu0 0.0
    %1057 = vmatprep.subr.mxu0 0.0
    %1058 = vmatpush1.msra.mxu0 0.0
    %1059 = vmatprep.subr.mxu0 0.0
    %1060 = vmatpush1.msra.mxu0 0.0
    %1061 = vmatprep.subr.mxu0 0.0
    %1062 = vmatpush1.msra.mxu0 0.0
    %1063 = vmatprep.subr.mxu0 0.0
    %1064 = vmatpush1.msra.mxu0 0.0
    %1065 = vmatprep.subr.mxu0 0.0
    %1066 = vmatpush1.msra.mxu0 0.0
    %1067 = vmatprep.subr.mxu0 0.0
    %1068 = vmatpush1.msra.mxu0 0.0
    %1069 = vmatprep.subr.mxu0 0.0
    %1070 = vmatpush1.msra.mxu0 0.0
    %1071 = vmatprep.subr.mxu0 0.0
    %1072 = vmatpush1.msra.mxu0 0.0
    %1073 = vmatprep.subr.mxu0 0.0
    %1074 = vmatpush1.msra.mxu0 0.0
    %1075 = vmatprep.subr.mxu0 0.0
    %1076 = vmatpush1.msra.mxu0 0.0
    %1077 = vmatprep.subr.mxu0 0.0
    %1078 = vmatpush1.msra.mxu0 0.0
    %1079 = vmatprep.subr.mxu0 0.0
    %1080 = vmatpush1.msra.mxu0 0.0
    %1081 = vmatprep.subr.mxu0 0.0
    %1082 = vmatpush1.msra.mxu0 0.0
    %1083 = vmatprep.subr.mxu0 0.0
    %1084 = vmatpush1.msra.mxu0 0.0
    %1085 = vmatprep.subr.mxu0 0.0
    %1086 = vmatpush1.msra.mxu0 0.0
    %1087 = vmatprep.subr.mxu0 0.0
    %1088 = vmatpush1.msra.mxu0 0.0
    %1089 = vmatprep.subr.mxu0 0.0
    %1090 = vmatpush1.msra.mxu0 0.0
    %1091 = vmatprep.subr.mxu0 0.0
    %1092 = vmatpush1.msra.mxu0 0.0
    %1093 = vmatprep.subr.mxu0 0.0
    %1094 = vmatpush1.msra.mxu0 0.0
    %1095 = vmatprep.subr.mxu0 0.0
    %1096 = vmatpush1.msra.mxu0 0.0
    %1097 = vmatprep.subr.mxu0 0.0
    %1098 = vmatpush1.msra.mxu0 0.0
    %1099 = vmatprep.subr.mxu0 0.0
    %1100 = vmatpush1.msra.mxu0 0.0
    %1101 = vmatprep.subr.mxu0 0.0
    %1102 = vmatpush1.msra.mxu0 0.0
    %1103 = vmatprep.subr.mxu0 0.0
    %1104 = vmatpush1.msra.mxu0 0.0
    %1105 = vmatprep.subr.mxu0 0.0
    %1106 = vmatpush1.msra.mxu0 0.0
    %1107 = vmatprep.subr.mxu0 0.0
    %1108 = vmatpush1.msra.mxu0 0.0
    %1109 = vmatprep.subr.mxu0 0.0
    %1110 = vmatpush1.msra.mxu0 0.0
    %1111 = vmatprep.subr.mxu0 0.0
    %1112 = vmatpush1.msra.mxu0 0.0
    %1113 = vmatprep.subr.mxu0 0.0
    %1114 = vmatpush1.msra.mxu0 0.0
    %1115 = vmatprep.mubr.f32.mxu0 0.0
    %1116 = vmatmul.mubr.f32.gmra.mrb[0].mxu0 %v1049
    %v1117 = vpop.f32.mrb[0].mxu0
    %v1118 = vadd.f32 %v1033, %v1117
    %v1119 = vpop.f32.mrb[0].mxu0
    %1120 = vdwg.mxu0
    %v1121 = vadd.f32 %v1118, %v68
    %v1122 = vmax.f32 %v1121, 0.0
    %1124 = vrot.lane.b32.xlu0 %v276, 32
    %v1125 = vpop.permute.xlu0 %1124
    %v1127 = vsel %vm283, %v1122, %v1125
    %vm1128 = vcmask 523264
    %v1130 = vsel %vm1128, %v1127, 0
    %1132 = vmatprep.subr.mxu0 %v74
    %1133 = vmatpush1.msra.mxu0 %v73
    %1134 = vmatprep.subr.mxu0 %v76
    %1135 = vmatpush1.msra.mxu0 %v75
    %1136 = vmatprep.subr.mxu0 %v78
    %1137 = vmatpush1.msra.mxu0 %v77
    %1138 = vmatprep.subr.mxu0 %v80
    %1139 = vmatpush1.msra.mxu0 %v79
    %1140 = vmatprep.subr.mxu0 %v82
    %1141 = vmatpush1.msra.mxu0 %v81
    %1142 = vmatprep.subr.mxu0 %v84
    %1143 = vmatpush1.msra.mxu0 %v83
    %1144 = vmatprep.subr.mxu0 %v86
    %1145 = vmatpush1.msra.mxu0 %v85
    %1146 = vmatprep.subr.mxu0 %v88
    %1147 = vmatpush1.msra.mxu0 %v87
    %1148 = vmatprep.subr.mxu0 0.0
    %1149 = vmatpush1.msra.mxu0 0.0
    %1150 = vmatprep.subr.mxu0 0.0
    %1151 = vmatpush1.msra.mxu0 0.0
    %1152 = vmatprep.subr.mxu0 0.0
    %1153 = vmatpush1.msra.mxu0 0.0
    %1154 = vmatprep.subr.mxu0 0.0
    %1155 = vmatpush1.msra.mxu0 0.0
    %1156 = vmatprep.subr.mxu0 0.0
    %1157 = vmatpush1.msra.mxu0 0.0
    %1158 = vmatprep.subr.mxu0 0.0
    %1159 = vmatpush1.msra.mxu0 0.0
    %1160 = vmatprep.subr.mxu0 0.0
    %1161 = vmatpush1.msra.mxu0 0.0
    %1162 = vmatprep.subr.mxu0 0.0
    %1163 = vmatpush1.msra.mxu0 0.0
    %1164 = vmatprep.subr.mxu0 0.0
    %1165 = vmatpush1.msra.mxu0 0.0
    %1166 = vmatprep.subr.mxu0 0.0
    %1167 = vmatpush1.msra.mxu0 0.0
    %1168 = vmatprep.subr.mxu0 0.0
    %1169 = vmatpush1.msra.mxu0 0.0
    %1170 = vmatprep.subr.mxu0 0.0
    %1171 = vmatpush1.msra.mxu0 0.0
    %1172 = vmatprep.subr.mxu0 0.0
    %1173 = vmatpush1.msra.mxu0 0.0
    %1174 = vmatprep.subr.mxu0 0.0
    %1175 = vmatpush1.msra.mxu0 0.0
    %1176 = vmatprep.subr.mxu0 0.0
    %1177 = vmatpush1.msra.mxu0 0.0
    %1178 = vmatprep.subr.mxu0 0.0
    %1179 = vmatpush1.msra.mxu0 0.0
    %1180 = vmatprep.subr.mxu0 0.0
    %1181 = vmatpush1.msra.mxu0 0.0
    %1182 = vmatprep.subr.mxu0 0.0
    %1183 = vmatpush1.msra.mxu0 0.0
    %1184 = vmatprep.subr.mxu0 0.0
    %1185 = vmatpush1.msra.mxu0 0.0
    %1186 = vmatprep.subr.mxu0 0.0
    %1187 = vmatpush1.msra.mxu0 0.0
    %1188 = vmatprep.subr.mxu0 0.0
    %1189 = vmatpush1.msra.mxu0 0.0
    %1190 = vmatprep.subr.mxu0 0.0
    %1191 = vmatpush1.msra.mxu0 0.0
    %1192 = vmatprep.subr.mxu0 0.0
    %1193 = vmatpush1.msra.mxu0 0.0
    %1194 = vmatprep.subr.mxu0 0.0
    %1195 = vmatpush1.msra.mxu0 0.0
    %1196 = vmatprep.mubr.f32.mxu0 0.0
    %1197 = vmatmul.mubr.f32.gmra.mrb[0].mxu0 %v1130
    %v1198 = vpop.f32.mrb[0].mxu0
    %v1199 = vadd.f32 0.0, %v1198
    %v1200 = vpop.f32.mrb[0].mxu0
    %v1201 = vadd.f32 0.0, %v1200
    %1202 = vdwg.mxu0
    %v1203 = vadd.f32 %v1199, %v66
    %1205 = vrot.lane.b32.xlu0 %v67, 96
    %v1206 = vpop.permute.xlu0 %1205
    %v1208 = vadd.f32 %v1199, %v1206
    %v1209 = vadd.f32 %v1201, %v1206
    %1211 = vrot.lane.b32.xlu0 %v1208, 32
    %v1212 = vpop.permute.xlu0 %1211
    %v1214 = vadd.f32 %v1203, %v1212
    %v1215 = vxor.u32 %v1214, 2147483648
    %v1216 = vmul.f32 %v1215, 1.442695
    %v1217 = vpow.pop %v1216
    %v1218 = vadd.f32 %v1217, 1.0
    %v1219 = vrcp.pop %v1218
    %v1220 = vmul.f32 1.0, %v1219
    %1222 = vrot.lane.b32.xlu0 %v1209, 32
    %v1223 = vpop.permute.xlu0 %1222
    %v1225 = vadd.f32 %v1203, %v1223
    %v1226 = vxor.u32 %v1225, 2147483648
    %v1227 = vmul.f32 %v1226, 1.442695
    %v1228 = vpow.pop %v1227
    %v1229 = vadd.f32 %v1228, 1.0
    %v1230 = vrcp.pop %v1229
    %v1231 = vmul.f32 1.0, %v1230
    %1232 = vrot.lane.b32.xlu0 %v1209, 96
    %v1233 = vpop.permute.xlu0 %1232
    %v1235 = vmul.f32 %v1220, %v1233
    %1237 = vrot.lane.b32.xlu0 %v1235, 64
    %v1238 = vpop.permute.xlu0 %1237
    %v1240 = vadd.f32 %v1203, %v1238
    %v1241 = vtanh.pop %v1240
    %v1242 = vsub.f32 1.0, %v1231
    %1244 = vrot.lane.b32.xlu0 %v1241, 96
    %v1245 = vpop.permute.xlu0 %1244
    %v1247 = vmul.f32 %v1242, %v1245
    %v1248 = vmul.f32 %v1231, %v1125
    %v1249 = vadd.f32 %v1247, %v1248
    %v1250 = vmax.f32 %v1249, 0.0
    %1252 = vrot.lane.b32.xlu0 %v70, 32
    %v1253 = vpop.permute.xlu0 %1252
    %v1255 = vmul.f32 %v1250, %v1253
    %1257 = vrot.lane.b32.xlu0 %v1255, 96
    %v1258 = vpop.permute.xlu0 %1257
    %v1260 = vsel %vm283, %v1258, 0.0
    %1261 = vadd.xlane.f32.xlu0 %v1260
    %v1262 = vpop.xlane.xlu0 %1261
    %1264 = vrot.lane.b32.xlu0 %v1249, 96
    %v1265 = vpop.permute.xlu0 %1264
    %1267 = vst.msk [vmem:[#allocation7] sm:$0xff] %vm283, %v1265
    %v1268 = vadd.s32 %v473, 4294967264
    %v1269 = vlaneseq
    %v1270 = vshrl.u32 %v1269, 7
    %v1271 = vsub.s32 %v1268, %v1270
    %v1272 = vrot.slane %v863, %v1271
    %v1273 = vadd.s32 %v473, 4294967256
    %v1274 = vlaneseq
    %v1275 = vshrl.u32 %v1274, 7
    %v1276 = vsub.s32 %v1273, %v1275
    %v1277 = vrot.slane %v868, %v1276
    %vm1278 = vcmask 392512
    %v1279 = vsel %vm1278, %v1277, %v1272
    %v1280 = vlaneseq
    %v1281 = vshrl.u32 %v1280, 7
    %v1282 = vsub.s32 %v1268, %v1281
    %v1283 = vrot.slane %v873, %v1282
    %v1284 = vlaneseq
    %v1285 = vshrl.u32 %v1284, 7
    %v1286 = vsub.s32 %v1273, %v1285
    %v1287 = vrot.slane %v878, %v1286
    %v1288 = vsel %vm1278, %v1287, %v1283
    %v1289 = vlaneseq
    %v1290 = vshrl.u32 %v1289, 7
    %v1291 = vsub.s32 %v1268, %v1290
    %v1292 = vrot.slane %v883, %v1291
    %v1293 = vlaneseq
    %v1294 = vshrl.u32 %v1293, 7
    %v1295 = vsub.s32 %v1273, %v1294
    %v1296 = vrot.slane %v888, %v1295
    %v1297 = vsel %vm1278, %v1296, %v1292
    %v1298 = vlaneseq
    %v1299 = vshrl.u32 %v1298, 7
    %v1300 = vsub.s32 %v1268, %v1299
    %v1301 = vrot.slane %v893, %v1300
    %v1302 = vlaneseq
    %v1303 = vshrl.u32 %v1302, 7
    %v1304 = vsub.s32 %v1273, %v1303
    %v1305 = vrot.slane %v898, %v1304
    %v1306 = vsel %vm1278, %v1305, %v1301
    %v1307 = vlaneseq
    %v1308 = vshrl.u32 %v1307, 7
    %v1309 = vsub.s32 %v1268, %v1308
    %v1310 = vrot.slane %v903, %v1309
    %v1311 = vlaneseq
    %v1312 = vshrl.u32 %v1311, 7
    %v1313 = vsub.s32 %v1273, %v1312
    %v1314 = vrot.slane %v908, %v1313
    %v1315 = vsel %vm1278, %v1314, %v1310
    %v1316 = vlaneseq
    %v1317 = vshrl.u32 %v1316, 7
    %v1318 = vsub.s32 %v1268, %v1317
    %v1319 = vrot.slane %v913, %v1318
    %v1320 = vlaneseq
    %v1321 = vshrl.u32 %v1320, 7
    %v1322 = vsub.s32 %v1273, %v1321
    %v1323 = vrot.slane %v918, %v1322
    %v1324 = vsel %vm1278, %v1323, %v1319
    %v1325 = vlaneseq
    %v1326 = vshrl.u32 %v1325, 7
    %v1327 = vsub.s32 %v1268, %v1326
    %v1328 = vrot.slane %v923, %v1327
    %v1329 = vlaneseq
    %v1330 = vshrl.u32 %v1329, 7
    %v1331 = vsub.s32 %v1273, %v1330
    %v1332 = vrot.slane %v928, %v1331
    %v1333 = vsel %vm1278, %v1332, %v1328
    %v1334 = vlaneseq
    %v1335 = vshrl.u32 %v1334, 7
    %v1336 = vsub.s32 %v1268, %v1335
    %v1337 = vrot.slane %v933, %v1336
    %v1338 = vlaneseq
    %v1339 = vshrl.u32 %v1338, 7
    %v1340 = vsub.s32 %v1273, %v1339
    %v1341 = vrot.slane %v938, %v1340
    %v1342 = vsel %vm1278, %v1341, %v1337
    %v1343 = vsel %vm548, %v1288, %v1279
    %v1344 = vsel %vm550, %v1297, %v1343
    %v1345 = vsel %vm552, %v1306, %v1344
    %v1346 = vsel %vm554, %v1315, %v1345
    %v1347 = vsel %vm556, %v1324, %v1346
    %v1348 = vsel %vm558, %v1333, %v1347
    %v1349 = vsel %vm560, %v1342, %v1348
    %vm1351 = vcmask 392448
    %1352 = vst.msk [vmem:[#allocation7] sm:$0xff] %vm1351, %v1349
    %vm1353 = vcmask 400768
    %1354 = vst.msk [vmem:[#allocation7] sm:$0xff] %vm1353, %v1262
    // Predicated region
    $region30: #{tpu_custom_call.1} parent=1 // pred_check
      _
    $region31: #{tpu_custom_call.1} parent=1 // pred_check_branch
      %1356 = sbr.rel (0) target = $region33
    $region32: #{tpu_custom_call.1} parent=1 // pred_region
      %s1358 = ssub.s32 128, 128
      %1359 = vsyncadd [#allocation4], %s1358
      %s1361 = sshll.u32 [#allocation7], 4
      %s1362 = int_to_ptr.vmem [resolvable:$true] %s1361
      %1364 = dma.vmem_to_hbm [thread:$0]  %s1362, 128, %s5, [#allocation4]
    $region33: #{tpu_custom_call.1} parent=1 // pred_fallthru
      _
    // Predicated region
    $region34: #{tpu_custom_call.1} parent=1 // pred_check
      _
    $region35: #{tpu_custom_call.1} parent=1 // pred_check_branch
      %1366 = sbr.rel (0) target = $region37
    $region36: #{tpu_custom_call.1} parent=1 // pred_region
      %1367 = dma.done [#allocation4], 128
    $region37: #{tpu_custom_call.1} parent=1 // pred_fallthru
      _
    %1368 = vsyncpa [#allocation3], 1
    %1369 = vsyncpa [#allocation6], 1
    %1370 = vsyncpa [#allocation4], 1

</llo_original>
